<compile_context>
chip_gen: v7x
topology: tpu7x:2x2x1
jax: 0.10.0
libtpu: 0.0.40
codegen_flags: <defaults>
</compile_context>

<pallas_src>
from functools import lru_cache

import numpy as np
import jax
import jax.numpy as jnp
from jax.experimental import pallas as pl
from jax.experimental.pallas import tpu as pltpu

MIN_ZOOM = 1.0
MAX_ZOOM = 1.5
NUM_ZOOM_LEVELS = 8            # quantized zoom levels -> bounded number of compilations

_LANE = 128                    # lane width
_SUB_BF16 = 16                 # bf16 sublane packing
_ROW_TILE = 256                # default output-row tile (multiple of 16)
_COL_TILE = 512                # default output-col tile (multiple of 128)
_SMALL_BYTES = 4 << 20         # below this total working set, use the single-shot kernel


def _rup(x: int, m: int) -> int:
    return ((x + m - 1) // m) * m


def _bilinear_matrix_np(out_size: int, in_size: int) -> np.ndarray:
    """(out_size, in_size) bilinear interpolation matrix.

    Matches torch.nn.functional.interpolate(mode='bilinear', align_corners=False,
    antialias=True) for scale >= 1 (upsampling), where antialias is a no-op.
    """
    scale = in_size / out_size
    dst = np.arange(out_size, dtype=np.float64)
    src = (dst + 0.5) * scale - 0.5
    src = np.maximum(src, 0.0)                       # PyTorch clamps negative src to 0
    x0 = np.clip(np.floor(src).astype(np.int64), 0, in_size - 1)
    x1 = np.minimum(x0 + 1, in_size - 1)
    lam = (src - x0).astype(np.float32)
    w = np.zeros((out_size, in_size), np.float32)
    rows = np.arange(out_size)
    np.add.at(w, (rows, x0), 1.0 - lam)
    np.add.at(w, (rows, x1), lam)
    return w


# --------------------- single-shot kernel (small images) ----------------------

def _small_kernel(img_ref, wh_ref, wwT_ref, out_ref):
    wh = wh_ref[...]                                  # (hfp, h) bf16
    wwT = wwT_ref[...]                                # (w, woutp) bf16
    for ci in range(img_ref.shape[0]):                # static channel unroll (c is tiny)
        img = img_ref[ci].astype(jnp.bfloat16)        # cast on the VPU, no HBM copy
        tmp = jnp.dot(wh, img, preferred_element_type=jnp.float32)
        out = jnp.dot(tmp.astype(jnp.bfloat16), wwT,
                      preferred_element_type=jnp.float32)
        out_ref[ci] = out.astype(out_ref.dtype)


def _build_small(c, h, w, h_final, w_out, wh_f32, wwT_f32, in_dtype):
    hfp = _rup(h_final, _SUB_BF16)
    woutp = _rup(w_out, _LANE)

    wh_pad = np.zeros((hfp, h), np.float32)
    wh_pad[:h_final] = wh_f32
    wwT_pad = np.zeros((w, woutp), np.float32)
    wwT_pad[:, :w_out] = wwT_f32
    wh_b = jnp.asarray(wh_pad, dtype=jnp.bfloat16)
    wwT_b = jnp.asarray(wwT_pad, dtype=jnp.bfloat16)

    it = in_dtype.itemsize
    need = (c * h * w * it                      # image (single-buffered)
            + 2 * (hfp * h * 2 + w * woutp * 2 + c * hfp * woutp * 2))
    vmem_limit = int(min(max(need + (4 << 20), 16 << 20), 56 << 20))

    call = pl.pallas_call(
        _small_kernel,
        out_shape=jax.ShapeDtypeStruct((c, hfp, woutp), jnp.bfloat16),
        grid=(1,),
        in_specs=[
            # image block equals the full array dims -> (8,128) rule satisfied, no padding copy
            pl.BlockSpec((c, h, w), lambda i: (0, 0, 0), pipeline_mode=pl.Buffered(1)),
            pl.BlockSpec((hfp, h), lambda i: (0, 0)),
            pl.BlockSpec((w, woutp), lambda i: (0, 0)),
        ],
        out_specs=pl.BlockSpec((c, hfp, woutp), lambda i: (0, 0, 0)),
        compiler_params=pltpu.CompilerParams(
            dimension_semantics=("arbitrary",),
            vmem_limit_bytes=vmem_limit),
    )

    @jax.jit
    def fn(image):
        out = call(image, wh_b, wwT_b)
        # strip padding + cast back to the input dtype (fused into this HBM pass)
        return out[:, :h_final, :w_out].astype(in_dtype)

    return fn


# --------------------- banded streaming kernel (large images) -----------------

def _banded_kernel(band_start_ref, img_hbm, wh_ref, wwT_ref, out_ref,
                   band_vmem, tmp_vmem, dma_sem):
    ti = pl.program_id(0)          # output-row tile
    ci = pl.program_id(1)          # channel
    wi = pl.program_id(2)          # output-col tile (innermost)

    @pl.when(wi == 0)
    def _():
        # DMA only the input-row band this output-row tile needs, then do the
        # first (height) matmul once per (ti, ci); reuse across all width tiles.
        start = band_start_ref[ti]
        bh = band_vmem.shape[0]
        cp = pltpu.make_async_copy(img_hbm.at[ci, pl.ds(start, bh), :],
                                   band_vmem, dma_sem)
        cp.start()
        cp.wait()
        band = band_vmem[...].astype(jnp.bfloat16)                       # (bh, w)
        tmp = jnp.dot(wh_ref[0], band, preferred_element_type=jnp.float32)
        tmp_vmem[...] = tmp.astype(jnp.bfloat16)                         # (tile_hf, w)

    out = jnp.dot(tmp_vmem[...], wwT_ref[...],
                  preferred_element_type=jnp.float32)                    # (tile_hf, tile_wout)
    out_ref[0] = out.astype(out_ref.dtype)


def _build_banded(c, h, w, h_out, w_out, h_final, wh_f32, wwT_f32, in_dtype,
                  row_tile, col_tile):
    tile_hf = min(_rup(row_tile, _SUB_BF16), _rup(h_final, _SUB_BF16))
    tile_wout = min(_rup(col_tile, _LANE), _rup(w_out, _LANE))
    n_ti = -(-h_final // tile_hf)
    n_wi = -(-w_out // tile_wout)
    hfp = n_ti * tile_hf
    woutp = n_wi * tile_wout

    # Per-output-row-tile input-row bands (zoom >= 1 keeps each band <= tile_hf + 2 rows).
    scale_h = h / h_out
    lo = np.zeros(n_ti, np.int64)
    hi = np.zeros(n_ti, np.int64)
    for ti in range(n_ti):
        r0 = ti * tile_hf
        r1 = min((ti + 1) * tile_hf, h_final)
        dst = np.arange(r0, r1, dtype=np.float64)
        src = np.maximum((dst + 0.5) * scale_h - 0.5, 0.0)
        x0 = np.clip(np.floor(src).astype(np.int64), 0, h - 1)
        x1 = np.minimum(x0 + 1, h - 1)
        lo[ti] = x0.min()
        hi[ti] = x1.max() + 1
    band_h = int(min(h, _rup(int((hi - lo).max()), 8)))
    starts = np.maximum(np.minimum(lo, h - band_h), 0)       # band always fully in-bounds
    assert np.all(starts <= lo) and np.all(starts + band_h >= hi)

    # Wh stored as per-tile band slices (columns re-based to the band start).
    wh_pad = np.zeros((hfp, h), np.float32)
    wh_pad[:h_final] = wh_f32
    wh_bands = np.zeros((n_ti, tile_hf, band_h), np.float32)
    for ti in range(n_ti):
        s = int(starts[ti])
        wh_bands[ti] = wh_pad[ti * tile_hf:(ti + 1) * tile_hf, s:s + band_h]
    wwT_pad = np.zeros((w, woutp), np.float32)
    wwT_pad[:, :w_out] = wwT_f32

    wh_b = jnp.asarray(wh_bands, dtype=jnp.bfloat16)
    wwT_b = jnp.asarray(wwT_pad, dtype=jnp.bfloat16)
    band_start = jnp.asarray(starts.astype(np.int32))

    it = in_dtype.itemsize
    need = (2 * (tile_hf * band_h * 2 + w * tile_wout * 2 + tile_hf * tile_wout * 2)
            + band_h * w * it + tile_hf * w * 2)
    # headroom, capped so the budget is also safe on v7x's 64 MiB physical VMEM
    vmem_limit = int(min(max(need + (8 << 20), 24 << 20), 56 << 20))

    grid_spec = pltpu.PrefetchScalarGridSpec(
        num_scalar_prefetch=1,                        # band_start -> SMEM
        grid=(n_ti, c, n_wi),                         # wi innermost: band reused across it
        in_specs=[
            pl.BlockSpec(memory_space=pl.ANY),        # image stays in HBM; banded manual DMA
            pl.BlockSpec((1, tile_hf, band_h), lambda ti, ci, wi, bs: (ti, 0, 0)),
            pl.BlockSpec((w, tile_wout), lambda ti, ci, wi, bs: (0, wi)),
        ],
        out_specs=pl.BlockSpec((1, tile_hf, tile_wout),
                               lambda ti, ci, wi, bs: (ci, ti, wi)),
        scratch_shapes=[
            pltpu.VMEM((band_h, w), in_dtype),        # input-row band (original dtype)
            pltpu.VMEM((tile_hf, w), jnp.bfloat16),   # cached Wh @ band, reused per width tile
            pltpu.SemaphoreType.DMA,
        ],
    )

    call = pl.pallas_call(
        _banded_kernel,
        out_shape=jax.ShapeDtypeStruct((c, hfp, woutp), jnp.bfloat16),
        grid_spec=grid_spec,
        compiler_params=pltpu.CompilerParams(
            # v7x megacore split lands on the row-tile axis (not the 3-channel axis);
            # ci / wi are "arbitrary" because VMEM scratch carries state along them.
            dimension_semantics=("parallel", "arbitrary", "arbitrary"),
            vmem_limit_bytes=vmem_limit),
    )

    @jax.jit
    def fn(image):
        out = call(band_start, image, wh_b, wwT_b)
        return out[:, :h_final, :w_out].astype(in_dtype)

    return fn


# ----------------------------- cached builder ----------------------------------

@lru_cache(maxsize=None)
def _build_zoom_fn(c, h, w, h_out, w_out, dtype_name, force_banded, row_tile, col_tile):
    in_dtype = jnp.dtype(dtype_name)
    h_final = w_out if h_out > w_out else h_out       # CropTopSquare folded in

    wh_f32 = _bilinear_matrix_np(h_out, h)[:h_final]  # (h_final, h)
    wwT_f32 = _bilinear_matrix_np(w_out, w).T         # (w, w_out)

    small_bytes = (c * h * w * in_dtype.itemsize
                   + 2 * (h_final * h + w * w_out + c * h_final * w_out))
    if (not force_banded) and small_bytes <= _SMALL_BYTES:
        return _build_small(c, h, w, h_final, w_out, wh_f32, wwT_f32, in_dtype)
    return _build_banded(c, h, w, h_out, w_out, h_final, wh_f32, wwT_f32, in_dtype,
                         row_tile or _ROW_TILE, col_tile or _COL_TILE)


# ----------------------------- public API ---------------------------------------

def zoom_resize_crop(image: jnp.ndarray, zoom: float, *, force_banded: bool = False,
                     row_tile=None, col_tile=None) -> jnp.ndarray:
    """Deterministic zoom (>= 1) bilinear resize + CropTopSquare on the MXU."""
    c, h, w = image.shape
    h_out = int(zoom * h)                 # same truncation as the PyTorch module
    w_out = int(zoom * w)
    fn = _build_zoom_fn(c, h, w, h_out, w_out, str(image.dtype),
                        bool(force_banded), row_tile, col_tile)
    return fn(image)


def random_zoom_in(image: jnp.ndarray, key, min_zoom=MIN_ZOOM, max_zoom=MAX_ZOOM,
                   num_levels=NUM_ZOOM_LEVELS) -> jnp.ndarray:
    """RandomZoomIn.forward: random zoom in [min_zoom, max_zoom), resize, crop-top-square.

    The zoom is quantized to `num_levels` discrete levels in the half-open range
    [min_zoom, max_zoom) (endpoint excluded, matching the module) so only a bounded
    number of kernels is ever compiled per input shape; the level draw forces one
    small host sync on the PRNG key.
    """
    levels = np.linspace(min_zoom, max_zoom, num_levels, endpoint=False)
    idx = int(jax.random.randint(key, (), 0, num_levels))
    return zoom_resize_crop(image, float(levels[idx]))


# ----------------------------- reference & test ---------------------------------

def _reference(image, zoom):
    c, h, w = image.shape
    h_out, w_out = int(zoom * h), int(zoom * w)
    h_final = w_out if h_out > w_out else h_out
    wh = jnp.asarray(_bilinear_matrix_np(h_out, h)[:h_final])
    wwT = jnp.asarray(_bilinear_matrix_np(w_out, w).T)
    return jnp.einsum("oh,chw,wk->cok", wh, image.astype(jnp.float32), wwT)


if __name__ == "__main__":
    key = jax.random.PRNGKey(0)
    k1, k2, k3, k4, kz = jax.random.split(key, 5)

    img_tall = jax.random.uniform(k1, (3, 32, 24), dtype=jnp.float32)   # H > W -> crop
    img_wide = jax.random.uniform(k2, (3, 24, 40), dtype=jnp.float32)   # H < W -> no crop
    img_band_wide = jax.random.uniform(k3, (3, 96, 144), dtype=jnp.float32)
    img_band_tall = jax.random.uniform(k4, (3, 144, 96), dtype=jnp.float32)

    cases = [
        (img_tall, 1.5, {}),                                               # small path, crop
        (img_tall, 1.0, {}),                                               # identity resize
        (img_wide, 1.25, {}),                                              # small path, no crop
        # banded streaming path, exercised at small shapes via tiny forced tiles
        (img_band_wide, 1.25, dict(force_banded=True, row_tile=32, col_tile=128)),
        (img_band_tall, 1.5, dict(force_banded=True, row_tile=48, col_tile=128)),
    ]
    for img, zoom, kw in cases:
        out = jax.block_until_ready(zoom_resize_crop(img, zoom, **kw))
        ref = _reference(img, zoom)
        assert out.shape == ref.shape, (out.shape, ref.shape)
        assert out.dtype == img.dtype
        err = float(jnp.max(jnp.abs(out.astype(jnp.float32) - ref)))
        # bf16 MXU operands (f32 accumulation) -> loosened tolerance
        assert err < 3e-2, (zoom, kw, err)

    # Random path: quantized zoom, cached compilation.
    out = jax.block_until_ready(random_zoom_in(img_tall, kz))
    assert out.ndim == 3 and out.shape[0] == 3
    assert out.shape[1] == out.shape[2]          # square after CropTopSquare (H > W)
    assert out.dtype == img_tall.dtype

    print("KERNEL_OK")
</pallas_src>

<mosaic_0001>
module attributes {stable_mosaic.version = 11 : i64} {
  func.func @_small_kernel(%arg0: i32, %arg1: memref<3x32x24xf32, #tpu.memory_space<vmem>>, %arg2: memref<48x32xbf16, #tpu.memory_space<vmem>>, %arg3: memref<24x128xbf16, #tpu.memory_space<vmem>>, %arg4: memref<3x48x128xbf16, #tpu.memory_space<vmem>>) attributes {dimension_semantics = [#tpu.dimension_semantics<arbitrary>], iteration_bounds = array<i64: 1>, scalar_prefetch = 0 : i64, scratch_operands = 0 : i64, tpu.core_type = #tpu.core_type<tc>, window_params = [{pipeline_mode = #tpu.pipeline_mode<synchronous>, transform_indices = @transform_0, window_bounds = array<i64: 3, 32, 24>}, {pipeline_mode = #tpu.pipeline_mode<synchronous>, transform_indices = @transform_1, window_bounds = array<i64: 48, 32>}, {pipeline_mode = #tpu.pipeline_mode<synchronous>, transform_indices = @transform_2, window_bounds = array<i64: 24, 128>}, {pipeline_mode = #tpu.pipeline_mode<synchronous>, transform_indices = @transform_3, window_bounds = array<i64: 3, 48, 128>}]} {
    %c0 = arith.constant 0 : index
    %c0_0 = arith.constant 0 : index
    %0 = vector.load %arg2[%c0, %c0_0] : memref<48x32xbf16, #tpu.memory_space<vmem>>, vector<48x32xbf16>
    %c0_1 = arith.constant 0 : index
    %c0_2 = arith.constant 0 : index
    %1 = vector.load %arg3[%c0_1, %c0_2] : memref<24x128xbf16, #tpu.memory_space<vmem>>, vector<24x128xbf16>
    %c0_3 = arith.constant 0 : index
    %c0_4 = arith.constant 0 : index
    %c0_5 = arith.constant 0 : index
    %2 = vector.load %arg1[%c0_3, %c0_4, %c0_5] : memref<3x32x24xf32, #tpu.memory_space<vmem>>, vector<1x32x24xf32>
    %3 = vector.shape_cast %2 : vector<1x32x24xf32> to vector<32x24xf32>
    %4 = arith.truncf %3 : vector<32x24xf32> to vector<32x24xbf16>
    %cst = arith.constant dense<0.000000e+00> : vector<48x24xf32>
    %5 = tpu.matmul %0, %4, %cst {dimension_numbers = #tpu.dot_dimension_numbers<[1], [0], [0], [1], [0, 0, 1, 1], [], []>} : vector<48x32xbf16>, vector<32x24xbf16>, vector<48x24xf32> -> vector<48x24xf32>
    %6 = arith.truncf %5 : vector<48x24xf32> to vector<48x24xbf16>
    %cst_6 = arith.constant dense<0.000000e+00> : vector<48x128xf32>
    %7 = tpu.matmul %6, %1, %cst_6 {dimension_numbers = #tpu.dot_dimension_numbers<[1], [0], [0], [1], [0, 0, 1, 1], [], []>} : vector<48x24xbf16>, vector<24x128xbf16>, vector<48x128xf32> -> vector<48x128xf32>
    %8 = arith.truncf %7 : vector<48x128xf32> to vector<48x128xbf16>
    %c0_7 = arith.constant 0 : index
    %c0_8 = arith.constant 0 : index
    %c0_9 = arith.constant 0 : index
    %9 = vector.load %arg4[%c0_7, %c0_8, %c0_9] : memref<3x48x128xbf16, #tpu.memory_space<vmem>>, vector<1x48x128xbf16>
    %10 = vector.shape_cast %9 : vector<1x48x128xbf16> to vector<48x128xbf16>
    %11 = vector.shape_cast %8 : vector<48x128xbf16> to vector<1x48x128xbf16>
    tpu.vector_store %arg4[%c0_7, %c0_8, %c0_9], %11 {strides = array<i32>} : memref<3x48x128xbf16, #tpu.memory_space<vmem>>, vector<1x48x128xbf16>,
    %c1 = arith.constant 1 : index
    %c0_10 = arith.constant 0 : index
    %c0_11 = arith.constant 0 : index
    %12 = vector.load %arg1[%c1, %c0_10, %c0_11] : memref<3x32x24xf32, #tpu.memory_space<vmem>>, vector<1x32x24xf32>
    %13 = vector.shape_cast %12 : vector<1x32x24xf32> to vector<32x24xf32>
    %14 = arith.truncf %13 : vector<32x24xf32> to vector<32x24xbf16>
    %cst_12 = arith.constant dense<0.000000e+00> : vector<48x24xf32>
    %15 = tpu.matmul %0, %14, %cst_12 {dimension_numbers = #tpu.dot_dimension_numbers<[1], [0], [0], [1], [0, 0, 1, 1], [], []>} : vector<48x32xbf16>, vector<32x24xbf16>, vector<48x24xf32> -> vector<48x24xf32>
    %16 = arith.truncf %15 : vector<48x24xf32> to vector<48x24xbf16>
    %cst_13 = arith.constant dense<0.000000e+00> : vector<48x128xf32>
    %17 = tpu.matmul %16, %1, %cst_13 {dimension_numbers = #tpu.dot_dimension_numbers<[1], [0], [0], [1], [0, 0, 1, 1], [], []>} : vector<48x24xbf16>, vector<24x128xbf16>, vector<48x128xf32> -> vector<48x128xf32>
    %18 = arith.truncf %17 : vector<48x128xf32> to vector<48x128xbf16>
    %c1_14 = arith.constant 1 : index
    %c0_15 = arith.constant 0 : index
    %c0_16 = arith.constant 0 : index
    %19 = vector.load %arg4[%c1_14, %c0_15, %c0_16] : memref<3x48x128xbf16, #tpu.memory_space<vmem>>, vector<1x48x128xbf16>
    %20 = vector.shape_cast %19 : vector<1x48x128xbf16> to vector<48x128xbf16>
    %21 = vector.shape_cast %18 : vector<48x128xbf16> to vector<1x48x128xbf16>
    tpu.vector_store %arg4[%c1_14, %c0_15, %c0_16], %21 {strides = array<i32>} : memref<3x48x128xbf16, #tpu.memory_space<vmem>>, vector<1x48x128xbf16>,
    %c2 = arith.constant 2 : index
    %c0_17 = arith.constant 0 : index
    %c0_18 = arith.constant 0 : index
    %22 = vector.load %arg1[%c2, %c0_17, %c0_18] : memref<3x32x24xf32, #tpu.memory_space<vmem>>, vector<1x32x24xf32>
    %23 = vector.shape_cast %22 : vector<1x32x24xf32> to vector<32x24xf32>
    %24 = arith.truncf %23 : vector<32x24xf32> to vector<32x24xbf16>
    %cst_19 = arith.constant dense<0.000000e+00> : vector<48x24xf32>
    %25 = tpu.matmul %0, %24, %cst_19 {dimension_numbers = #tpu.dot_dimension_numbers<[1], [0], [0], [1], [0, 0, 1, 1], [], []>} : vector<48x32xbf16>, vector<32x24xbf16>, vector<48x24xf32> -> vector<48x24xf32>
    %26 = arith.truncf %25 : vector<48x24xf32> to vector<48x24xbf16>
    %cst_20 = arith.constant dense<0.000000e+00> : vector<48x128xf32>
    %27 = tpu.matmul %26, %1, %cst_20 {dimension_numbers = #tpu.dot_dimension_numbers<[1], [0], [0], [1], [0, 0, 1, 1], [], []>} : vector<48x24xbf16>, vector<24x128xbf16>, vector<48x128xf32> -> vector<48x128xf32>
    %28 = arith.truncf %27 : vector<48x128xf32> to vector<48x128xbf16>
    %c2_21 = arith.constant 2 : index
    %c0_22 = arith.constant 0 : index
    %c0_23 = arith.constant 0 : index
    %29 = vector.load %arg4[%c2_21, %c0_22, %c0_23] : memref<3x48x128xbf16, #tpu.memory_space<vmem>>, vector<1x48x128xbf16>
    %30 = vector.shape_cast %29 : vector<1x48x128xbf16> to vector<48x128xbf16>
    %31 = vector.shape_cast %28 : vector<48x128xbf16> to vector<1x48x128xbf16>
    tpu.vector_store %arg4[%c2_21, %c0_22, %c0_23], %31 {strides = array<i32>} : memref<3x48x128xbf16, #tpu.memory_space<vmem>>, vector<1x48x128xbf16>,
    return
  }
  func.func @transform_0(%arg0: i32) -> (i32, i32, i32) {
    %c0_i32 = arith.constant 0 : i32
    %c0_i32_0 = arith.constant 0 : i32
    %c0_i32_1 = arith.constant 0 : i32
    %c0_i32_2 = arith.constant 0 : i32
    return %c0_i32, %c0_i32_0, %c0_i32_1 : i32, i32, i32
  }
  func.func @transform_1(%arg0: i32) -> (i32, i32) {
    %c0_i32 = arith.constant 0 : i32
    %c0_i32_0 = arith.constant 0 : i32
    %c0_i32_1 = arith.constant 0 : i32
    return %c0_i32, %c0_i32_0 : i32, i32
  }
  func.func @transform_2(%arg0: i32) -> (i32, i32) {
    %c0_i32 = arith.constant 0 : i32
    %c0_i32_0 = arith.constant 0 : i32
    %c0_i32_1 = arith.constant 0 : i32
    return %c0_i32, %c0_i32_0 : i32, i32
  }
  func.func @transform_3(%arg0: i32) -> (i32, i32, i32) {
    %c0_i32 = arith.constant 0 : i32
    %c0_i32_0 = arith.constant 0 : i32
    %c0_i32_1 = arith.constant 0 : i32
    %c0_i32_2 = arith.constant 0 : i32
    return %c0_i32, %c0_i32_0, %c0_i32_1 : i32, i32, i32
  }
}

</mosaic_0001>

<llo_original>
// kernel: fn.1
$region0: #{fn.1}
  #allocation0 [shape = 'u32[]', space=smem, size = 0x4, offset = 0x4, fixed_abs, tag = 'smem constant byte address 0x4 - core index']
  #allocation1 [shape = 'u32[144,128]{1,0:T(1,128)}', space=vmem, size = 0x12000, scoped, tag = 'internal scratch']
  %s0 = inlined_call_operand.vmem [shape: f32[3,32,24], index: 0, kind: input, shape index: {}]
  %s1 = inlined_call_operand.vmem [shape: bf16[48,32], index: 1, kind: input, shape index: {}]
  %s2 = inlined_call_operand.vmem [shape: bf16[24,128], index: 2, kind: input, shape index: {}]
  %s3 = inlined_call_operand.vmem [shape: bf16[3,48,128], index: 3, kind: output, shape index: {}]
  %s4 = sld [smem:[#allocation0]]
  $region22: #{fn.1} parent=0
    _
  %s6 = ssub.s32 1, %s4
  %s7 = scalar_select 0, %s6, %s4
  // Predicated region
  $region2: #{fn.1} parent=0 // pred_check
    _
  $region3: #{fn.1} parent=0 // pred_check_branch
    %9 = sbr.rel (0) target = $region5
  $region4: #{fn.1} parent=0 // pred_region
    _
  $region5: #{fn.1} parent=0 // pred_fallthru
    _
  // Predicated region
  $region6: #{fn.1} parent=0 // pred_check
    _
  $region7: #{fn.1} parent=0 // pred_check_branch
    %11 = sbr.rel (0) target = $region9
  $region8: #{fn.1} parent=0 // pred_region
    _
  $region9: #{fn.1} parent=0 // pred_fallthru
    _
  // Predicated region
  $region10: #{fn.1} parent=0 // pred_check
    _
  $region11: #{fn.1} parent=0 // pred_check_branch
    %13 = sbr.rel (0) target = $region13
  $region12: #{fn.1} parent=0 // pred_region
    _
  $region13: #{fn.1} parent=0 // pred_fallthru
    _
  %v15 = vld [vmem:[%s1] sm:$0xf]
  %v16 = vld [vmem:[%s1 + $0x4] sm:$0xf]
  %v17 = vld [vmem:[%s1 + $0x8] sm:$0xf]
  %v18 = vld [vmem:[%s1 + $0xc] sm:$0xf]
  %v19 = vld [vmem:[%s1 + $0x10] sm:$0xf]
  %v20 = vld [vmem:[%s1 + $0x14] sm:$0xf]
  %v21 = vld [vmem:[%s2] sm:$0xf]
  %v22 = vld [vmem:[%s2 + $0x4] sm:$0xf]
  %v23 = vld [vmem:[%s2 + $0x8] sm:$0xf]
  %v24 = vld [vmem:[%s0] sm:$0xff]
  %v25 = vld [vmem:[%s0 + $0x8] sm:$0xff]
  %v26 = vld [vmem:[%s0 + $0x10] sm:$0xff]
  %v27 = vld [vmem:[%s0 + $0x18] sm:$0xff]
  %v28 = vpack.c.bf16 %v25, %v24
  %v29 = vpack.c.bf16 %v27, %v26
  %v36 = vunpack.c.l.b16 %v15
  %v37 = vunpack.c.l.b16 %v16
  %v38 = vunpack.c.l.b16 %v17
  %v39 = vunpack.c.l.b16 %v18
  %v40 = vunpack.c.l.b16 %v19
  %v41 = vunpack.c.l.b16 %v20
  %v42 = vpack.c.b16 %v37, %v36
  %v43 = vpack.c.b16 %v39, %v38
  %v44 = vpack.c.b16 %v41, %v40
  %vm45 = vcmask 261120
  %v47 = vsel %vm45, %v42, 0
  %v50 = vsel %vm45, %v43, 0
  %v53 = vsel %vm45, %v44, 0
  %55 = vmatprep.subr.bf16.mxu0 0
  %56 = vmatpush1.bf16.msra.mxu0 %v28
  %57 = vmatprep.subr.bf16.mxu0 0
  %58 = vmatpush1.bf16.msra.mxu0 %v29
  %59 = vmatprep.subr.bf16.mxu0 0
  %60 = vmatpush1.bf16.msra.mxu0 0
  %61 = vmatprep.subr.bf16.mxu0 0
  %62 = vmatpush1.bf16.msra.mxu0 0
  %63 = vmatprep.subr.bf16.mxu0 0
  %64 = vmatpush1.bf16.msra.mxu0 0
  %65 = vmatprep.subr.bf16.mxu0 0
  %66 = vmatpush1.bf16.msra.mxu0 0
  %67 = vmatprep.subr.bf16.mxu0 0
  %68 = vmatpush1.bf16.msra.mxu0 0
  %69 = vmatprep.subr.bf16.mxu0 0
  %70 = vmatpush1.bf16.msra.mxu0 0
  %71 = vmatprep.subr.bf16.mxu0 0
  %72 = vmatpush1.bf16.msra.mxu0 0
  %73 = vmatprep.subr.bf16.mxu0 0
  %74 = vmatpush1.bf16.msra.mxu0 0
  %75 = vmatprep.subr.bf16.mxu0 0
  %76 = vmatpush1.bf16.msra.mxu0 0
  %77 = vmatprep.subr.bf16.mxu0 0
  %78 = vmatpush1.bf16.msra.mxu0 0
  %79 = vmatprep.subr.bf16.mxu0 0
  %80 = vmatpush1.bf16.msra.mxu0 0
  %81 = vmatprep.subr.bf16.mxu0 0
  %82 = vmatpush1.bf16.msra.mxu0 0
  %83 = vmatprep.subr.bf16.mxu0 0
  %84 = vmatpush1.bf16.msra.mxu0 0
  %85 = vmatprep.subr.bf16.mxu0 0
  %86 = vmatpush1.bf16.msra.mxu0 0
  %87 = vmatprep.mubr.bf16.mxu0 0
  %88 = vmatmul.mubr.bf16.gmra.mrb[0].mxu0 %v47
  %v89 = vpop.f32.mrb[0].mxu0
  %v90 = vadd.f32 0.0, %v89
  %v91 = vpop.f32.mrb[0].mxu0
  %v92 = vpop.f32.mrb[0].mxu0
  %v93 = vadd.f32 0.0, %v92
  %v94 = vpop.f32.mrb[0].mxu0
  %95 = vmatprep.mubr.bf16.mxu0 0
  %96 = vmatmul.mubr.bf16.gmra.mrb[0].mxu0 %v50
  %v97 = vpop.f32.mrb[0].mxu0
  %v98 = vadd.f32 0.0, %v97
  %v99 = vpop.f32.mrb[0].mxu0
  %v100 = vpop.f32.mrb[0].mxu0
  %v101 = vadd.f32 0.0, %v100
  %v102 = vpop.f32.mrb[0].mxu0
  %103 = vmatprep.mubr.bf16.mxu0 0
  %104 = vmatmul.mubr.bf16.gmra.mrb[0].mxu0 %v53
  %v105 = vpop.f32.mrb[0].mxu0
  %v106 = vadd.f32 0.0, %v105
  %v107 = vpop.f32.mrb[0].mxu0
  %v108 = vpop.f32.mrb[0].mxu0
  %v109 = vadd.f32 0.0, %v108
  %v110 = vpop.f32.mrb[0].mxu0
  %111 = vdwg.mxu0
  %v112 = vpack.c.bf16 %v93, %v90
  %v113 = vpack.c.bf16 %v101, %v98
  %v114 = vpack.c.bf16 %v109, %v106
  %v118 = vunpack.c.l.b16 %v21
  %v119 = vunpack.c.l.b16 %v22
  %v120 = vunpack.c.l.b16 %v23
  %v121 = vpack.c.b16 %v119, %v118
  %v122 = vpack.c.b16 %v120, %v120
  %vm124 = vcmask 195584
  %v126 = vsel %vm124, %v112, 0
  %v129 = vsel %vm124, %v113, 0
  %v132 = vsel %vm124, %v114, 0
  %vm134 = vcmask 1043456
  %v136 = vsel %vm134, %v122, 0
  %138 = vmatprep.subr.bf16.mxu0 0
  %139 = vmatpush1.bf16.msra.mxu0 %v121
  %140 = vmatprep.subr.bf16.mxu0 0
  %141 = vmatpush1.bf16.msra.mxu0 %v136
  %142 = vmatprep.subr.bf16.mxu0 0
  %143 = vmatpush1.bf16.msra.mxu0 0
  %144 = vmatprep.subr.bf16.mxu0 0
  %145 = vmatpush1.bf16.msra.mxu0 0
  %146 = vmatprep.subr.bf16.mxu0 0
  %147 = vmatpush1.bf16.msra.mxu0 0
  %148 = vmatprep.subr.bf16.mxu0 0
  %149 = vmatpush1.bf16.msra.mxu0 0
  %150 = vmatprep.subr.bf16.mxu0 0
  %151 = vmatpush1.bf16.msra.mxu0 0
  %152 = vmatprep.subr.bf16.mxu0 0
  %153 = vmatpush1.bf16.msra.mxu0 0
  %154 = vmatprep.subr.bf16.mxu0 0
  %155 = vmatpush1.bf16.msra.mxu0 0
  %156 = vmatprep.subr.bf16.mxu0 0
  %157 = vmatpush1.bf16.msra.mxu0 0
  %158 = vmatprep.subr.bf16.mxu0 0
  %159 = vmatpush1.bf16.msra.mxu0 0
  %160 = vmatprep.subr.bf16.mxu0 0
  %161 = vmatpush1.bf16.msra.mxu0 0
  %162 = vmatprep.subr.bf16.mxu0 0
  %163 = vmatpush1.bf16.msra.mxu0 0
  %164 = vmatprep.subr.bf16.mxu0 0
  %165 = vmatpush1.bf16.msra.mxu0 0
  %166 = vmatprep.subr.bf16.mxu0 0
  %167 = vmatpush1.bf16.msra.mxu0 0
  %168 = vmatprep.subr.bf16.mxu0 0
  %169 = vmatpush1.bf16.msra.mxu0 0
  %170 = vmatprep.mubr.bf16.mxu0 0
  %171 = vmatmul.mubr.bf16.gmra.mrb[0].mxu0 %v126
  %v172 = vpop.f32.mrb[0].mxu0
  %v173 = vadd.f32 0.0, %v172
  %v174 = vpop.f32.mrb[0].mxu0
  %v175 = vpop.f32.mrb[0].mxu0
  %v176 = vadd.f32 0.0, %v175
  %v177 = vpop.f32.mrb[0].mxu0
  %178 = vmatprep.mubr.bf16.mxu0 0
  %179 = vmatmul.mubr.bf16.gmra.mrb[0].mxu0 %v129
  %v180 = vpop.f32.mrb[0].mxu0
  %v181 = vadd.f32 0.0, %v180
  %v182 = vpop.f32.mrb[0].mxu0
  %v183 = vpop.f32.mrb[0].mxu0
  %v184 = vadd.f32 0.0, %v183
  %v185 = vpop.f32.mrb[0].mxu0
  %186 = vmatprep.mubr.bf16.mxu0 0
  %187 = vmatmul.mubr.bf16.gmra.mrb[0].mxu0 %v132
  %v188 = vpop.f32.mrb[0].mxu0
  %v189 = vadd.f32 0.0, %v188
  %v190 = vpop.f32.mrb[0].mxu0
  %v191 = vpop.f32.mrb[0].mxu0
  %v192 = vadd.f32 0.0, %v191
  %v193 = vpop.f32.mrb[0].mxu0
  %194 = vdwg.mxu0
  %v195 = vpack.c.bf16 %v176, %v173
  %v196 = vpack.c.bf16 %v184, %v181
  %v197 = vpack.c.bf16 %v192, %v189
  %v201 = vunpack.c.l.b16 %v195
  %v202 = vunpack.c.h.b16 %v195
  %v203 = vunpack.c.l.b16 %v196
  %v204 = vunpack.c.h.b16 %v196
  %v205 = vunpack.c.l.b16 %v197
  %v206 = vunpack.c.h.b16 %v197
  %v207 = vpack.c.b16 %v201, %v201
  %v208 = vpack.c.b16 %v202, %v202
  %v209 = vpack.c.b16 %v203, %v203
  %v210 = vpack.c.b16 %v204, %v204
  %v211 = vpack.c.b16 %v205, %v205
  %v212 = vpack.c.b16 %v206, %v206
  %219 = vst [vmem:[%s3] sm:$0xf] %v207
  %220 = vst [vmem:[%s3 + $0x4] sm:$0xf] %v208
  %221 = vst [vmem:[%s3 + $0x8] sm:$0xf] %v209
  %222 = vst [vmem:[%s3 + $0xc] sm:$0xf] %v210
  %223 = vst [vmem:[%s3 + $0x10] sm:$0xf] %v211
  %224 = vst [vmem:[%s3 + $0x14] sm:$0xf] %v212
  %s225 = scalar_lea.vmem %s0, 32
  %v226 = vld [vmem:[%s225] sm:$0xff]
  %v227 = vld [vmem:[%s225 + $0x8] sm:$0xff]
  %v228 = vld [vmem:[%s225 + $0x10] sm:$0xff]
  %v229 = vld [vmem:[%s225 + $0x18] sm:$0xff]
  %v230 = vpack.c.bf16 %v227, %v226
  %v231 = vpack.c.bf16 %v229, %v228
  %232 = vmatprep.subr.bf16.mxu0 0
  %233 = vmatpush1.bf16.msra.mxu0 %v230
  %234 = vmatprep.subr.bf16.mxu0 0
  %235 = vmatpush1.bf16.msra.mxu0 %v231
  %236 = vmatprep.subr.bf16.mxu0 0
  %237 = vmatpush1.bf16.msra.mxu0 0
  %238 = vmatprep.subr.bf16.mxu0 0
  %239 = vmatpush1.bf16.msra.mxu0 0
  %240 = vmatprep.subr.bf16.mxu0 0
  %241 = vmatpush1.bf16.msra.mxu0 0
  %242 = vmatprep.subr.bf16.mxu0 0
  %243 = vmatpush1.bf16.msra.mxu0 0
  %244 = vmatprep.subr.bf16.mxu0 0
  %245 = vmatpush1.bf16.msra.mxu0 0
  %246 = vmatprep.subr.bf16.mxu0 0
  %247 = vmatpush1.bf16.msra.mxu0 0
  %248 = vmatprep.subr.bf16.mxu0 0
  %249 = vmatpush1.bf16.msra.mxu0 0
  %250 = vmatprep.subr.bf16.mxu0 0
  %251 = vmatpush1.bf16.msra.mxu0 0
  %252 = vmatprep.subr.bf16.mxu0 0
  %253 = vmatpush1.bf16.msra.mxu0 0
  %254 = vmatprep.subr.bf16.mxu0 0
  %255 = vmatpush1.bf16.msra.mxu0 0
  %256 = vmatprep.subr.bf16.mxu0 0
  %257 = vmatpush1.bf16.msra.mxu0 0
  %258 = vmatprep.subr.bf16.mxu0 0
  %259 = vmatpush1.bf16.msra.mxu0 0
  %260 = vmatprep.subr.bf16.mxu0 0
  %261 = vmatpush1.bf16.msra.mxu0 0
  %262 = vmatprep.subr.bf16.mxu0 0
  %263 = vmatpush1.bf16.msra.mxu0 0
  %264 = vmatprep.mubr.bf16.mxu0 0
  %265 = vmatmul.mubr.bf16.gmra.mrb[0].mxu0 %v47
  %v266 = vpop.f32.mrb[0].mxu0
  %v267 = vadd.f32 0.0, %v266
  %v268 = vpop.f32.mrb[0].mxu0
  %v269 = vpop.f32.mrb[0].mxu0
  %v270 = vadd.f32 0.0, %v269
  %v271 = vpop.f32.mrb[0].mxu0
  %272 = vmatprep.mubr.bf16.mxu0 0
  %273 = vmatmul.mubr.bf16.gmra.mrb[0].mxu0 %v50
  %v274 = vpop.f32.mrb[0].mxu0
  %v275 = vadd.f32 0.0, %v274
  %v276 = vpop.f32.mrb[0].mxu0
  %v277 = vpop.f32.mrb[0].mxu0
  %v278 = vadd.f32 0.0, %v277
  %v279 = vpop.f32.mrb[0].mxu0
  %280 = vmatprep.mubr.bf16.mxu0 0
  %281 = vmatmul.mubr.bf16.gmra.mrb[0].mxu0 %v53
  %v282 = vpop.f32.mrb[0].mxu0
  %v283 = vadd.f32 0.0, %v282
  %v284 = vpop.f32.mrb[0].mxu0
  %v285 = vpop.f32.mrb[0].mxu0
  %v286 = vadd.f32 0.0, %v285
  %v287 = vpop.f32.mrb[0].mxu0
  %288 = vdwg.mxu0
  %v289 = vpack.c.bf16 %v270, %v267
  %v290 = vpack.c.bf16 %v278, %v275
  %v291 = vpack.c.bf16 %v286, %v283
  %v293 = vsel %vm124, %v289, 0
  %v296 = vsel %vm124, %v290, 0
  %v299 = vsel %vm124, %v291, 0
  %301 = vmatprep.subr.bf16.mxu0 0
  %302 = vmatpush1.bf16.msra.mxu0 %v121
  %303 = vmatprep.subr.bf16.mxu0 0
  %304 = vmatpush1.bf16.msra.mxu0 %v136
  %305 = vmatprep.subr.bf16.mxu0 0
  %306 = vmatpush1.bf16.msra.mxu0 0
  %307 = vmatprep.subr.bf16.mxu0 0
  %308 = vmatpush1.bf16.msra.mxu0 0
  %309 = vmatprep.subr.bf16.mxu0 0
  %310 = vmatpush1.bf16.msra.mxu0 0
  %311 = vmatprep.subr.bf16.mxu0 0
  %312 = vmatpush1.bf16.msra.mxu0 0
  %313 = vmatprep.subr.bf16.mxu0 0
  %314 = vmatpush1.bf16.msra.mxu0 0
  %315 = vmatprep.subr.bf16.mxu0 0
  %316 = vmatpush1.bf16.msra.mxu0 0
  %317 = vmatprep.subr.bf16.mxu0 0
  %318 = vmatpush1.bf16.msra.mxu0 0
  %319 = vmatprep.subr.bf16.mxu0 0
  %320 = vmatpush1.bf16.msra.mxu0 0
  %321 = vmatprep.subr.bf16.mxu0 0
  %322 = vmatpush1.bf16.msra.mxu0 0
  %323 = vmatprep.subr.bf16.mxu0 0
  %324 = vmatpush1.bf16.msra.mxu0 0
  %325 = vmatprep.subr.bf16.mxu0 0
  %326 = vmatpush1.bf16.msra.mxu0 0
  %327 = vmatprep.subr.bf16.mxu0 0
  %328 = vmatpush1.bf16.msra.mxu0 0
  %329 = vmatprep.subr.bf16.mxu0 0
  %330 = vmatpush1.bf16.msra.mxu0 0
  %331 = vmatprep.subr.bf16.mxu0 0
  %332 = vmatpush1.bf16.msra.mxu0 0
  %333 = vmatprep.mubr.bf16.mxu0 0
  %334 = vmatmul.mubr.bf16.gmra.mrb[0].mxu0 %v293
  %v335 = vpop.f32.mrb[0].mxu0
  %v336 = vadd.f32 0.0, %v335
  %v337 = vpop.f32.mrb[0].mxu0
  %v338 = vpop.f32.mrb[0].mxu0
  %v339 = vadd.f32 0.0, %v338
  %v340 = vpop.f32.mrb[0].mxu0
  %341 = vmatprep.mubr.bf16.mxu0 0
  %342 = vmatmul.mubr.bf16.gmra.mrb[0].mxu0 %v296
  %v343 = vpop.f32.mrb[0].mxu0
  %v344 = vadd.f32 0.0, %v343
  %v345 = vpop.f32.mrb[0].mxu0
  %v346 = vpop.f32.mrb[0].mxu0
  %v347 = vadd.f32 0.0, %v346
  %v348 = vpop.f32.mrb[0].mxu0
  %349 = vmatprep.mubr.bf16.mxu0 0
  %350 = vmatmul.mubr.bf16.gmra.mrb[0].mxu0 %v299
  %v351 = vpop.f32.mrb[0].mxu0
  %v352 = vadd.f32 0.0, %v351
  %v353 = vpop.f32.mrb[0].mxu0
  %v354 = vpop.f32.mrb[0].mxu0
  %v355 = vadd.f32 0.0, %v354
  %v356 = vpop.f32.mrb[0].mxu0
  %357 = vdwg.mxu0
  %v358 = vpack.c.bf16 %v339, %v336
  %v359 = vpack.c.bf16 %v347, %v344
  %v360 = vpack.c.bf16 %v355, %v352
  %v364 = vunpack.c.l.b16 %v358
  %v365 = vunpack.c.h.b16 %v358
  %v366 = vunpack.c.l.b16 %v359
  %v367 = vunpack.c.h.b16 %v359
  %v368 = vunpack.c.l.b16 %v360
  %v369 = vunpack.c.h.b16 %v360
  %v370 = vpack.c.b16 %v364, %v364
  %v371 = vpack.c.b16 %v365, %v365
  %v372 = vpack.c.b16 %v366, %v366
  %v373 = vpack.c.b16 %v367, %v367
  %v374 = vpack.c.b16 %v368, %v368
  %v375 = vpack.c.b16 %v369, %v369
  %s382 = scalar_lea.vmem %s3, 24
  %383 = vst [vmem:[%s382] sm:$0xf] %v370
  %384 = vst [vmem:[%s382 + $0x4] sm:$0xf] %v371
  %385 = vst [vmem:[%s382 + $0x8] sm:$0xf] %v372
  %386 = vst [vmem:[%s382 + $0xc] sm:$0xf] %v373
  %387 = vst [vmem:[%s382 + $0x10] sm:$0xf] %v374
  %388 = vst [vmem:[%s382 + $0x14] sm:$0xf] %v375
  %s389 = scalar_lea.vmem %s0, 64
  %v390 = vld [vmem:[%s389] sm:$0xff]
  %v391 = vld [vmem:[%s389 + $0x8] sm:$0xff]
  %v392 = vld [vmem:[%s389 + $0x10] sm:$0xff]
  %v393 = vld [vmem:[%s389 + $0x18] sm:$0xff]
  %v394 = vpack.c.bf16 %v391, %v390
  %v395 = vpack.c.bf16 %v393, %v392
  %396 = vmatprep.subr.bf16.mxu0 0
  %397 = vmatpush1.bf16.msra.mxu0 %v394
  %398 = vmatprep.subr.bf16.mxu0 0
  %399 = vmatpush1.bf16.msra.mxu0 %v395
  %400 = vmatprep.subr.bf16.mxu0 0
  %401 = vmatpush1.bf16.msra.mxu0 0
  %402 = vmatprep.subr.bf16.mxu0 0
  %403 = vmatpush1.bf16.msra.mxu0 0
  %404 = vmatprep.subr.bf16.mxu0 0
  %405 = vmatpush1.bf16.msra.mxu0 0
  %406 = vmatprep.subr.bf16.mxu0 0
  %407 = vmatpush1.bf16.msra.mxu0 0
  %408 = vmatprep.subr.bf16.mxu0 0
  %409 = vmatpush1.bf16.msra.mxu0 0
  %410 = vmatprep.subr.bf16.mxu0 0
  %411 = vmatpush1.bf16.msra.mxu0 0
  %412 = vmatprep.subr.bf16.mxu0 0
  %413 = vmatpush1.bf16.msra.mxu0 0
  %414 = vmatprep.subr.bf16.mxu0 0
  %415 = vmatpush1.bf16.msra.mxu0 0
  %416 = vmatprep.subr.bf16.mxu0 0
  %417 = vmatpush1.bf16.msra.mxu0 0
  %418 = vmatprep.subr.bf16.mxu0 0
  %419 = vmatpush1.bf16.msra.mxu0 0
  %420 = vmatprep.subr.bf16.mxu0 0
  %421 = vmatpush1.bf16.msra.mxu0 0
  %422 = vmatprep.subr.bf16.mxu0 0
  %423 = vmatpush1.bf16.msra.mxu0 0
  %424 = vmatprep.subr.bf16.mxu0 0
  %425 = vmatpush1.bf16.msra.mxu0 0
  %426 = vmatprep.subr.bf16.mxu0 0
  %427 = vmatpush1.bf16.msra.mxu0 0
  %428 = vmatprep.mubr.bf16.mxu0 0
  %429 = vmatmul.mubr.bf16.gmra.mrb[0].mxu0 %v47
  %v430 = vpop.f32.mrb[0].mxu0
  %v431 = vadd.f32 0.0, %v430
  %v432 = vpop.f32.mrb[0].mxu0
  %v433 = vpop.f32.mrb[0].mxu0
  %v434 = vadd.f32 0.0, %v433
  %v435 = vpop.f32.mrb[0].mxu0
  %436 = vmatprep.mubr.bf16.mxu0 0
  %437 = vmatmul.mubr.bf16.gmra.mrb[0].mxu0 %v50
  %v438 = vpop.f32.mrb[0].mxu0
  %v439 = vadd.f32 0.0, %v438
  %v440 = vpop.f32.mrb[0].mxu0
  %v441 = vpop.f32.mrb[0].mxu0
  %v442 = vadd.f32 0.0, %v441
  %v443 = vpop.f32.mrb[0].mxu0
  %444 = vmatprep.mubr.bf16.mxu0 0
  %445 = vmatmul.mubr.bf16.gmra.mrb[0].mxu0 %v53
  %v446 = vpop.f32.mrb[0].mxu0
  %v447 = vadd.f32 0.0, %v446
  %v448 = vpop.f32.mrb[0].mxu0
  %v449 = vpop.f32.mrb[0].mxu0
  %v450 = vadd.f32 0.0, %v449
  %v451 = vpop.f32.mrb[0].mxu0
  %452 = vdwg.mxu0
  %v453 = vpack.c.bf16 %v434, %v431
  %v454 = vpack.c.bf16 %v442, %v439
  %v455 = vpack.c.bf16 %v450, %v447
  %v457 = vsel %vm124, %v453, 0
  %v460 = vsel %vm124, %v454, 0
  %v463 = vsel %vm124, %v455, 0
  %465 = vmatprep.subr.bf16.mxu0 0
  %466 = vmatpush1.bf16.msra.mxu0 %v121
  %467 = vmatprep.subr.bf16.mxu0 0
  %468 = vmatpush1.bf16.msra.mxu0 %v136
  %469 = vmatprep.subr.bf16.mxu0 0
  %470 = vmatpush1.bf16.msra.mxu0 0
  %471 = vmatprep.subr.bf16.mxu0 0
  %472 = vmatpush1.bf16.msra.mxu0 0
  %473 = vmatprep.subr.bf16.mxu0 0
  %474 = vmatpush1.bf16.msra.mxu0 0
  %475 = vmatprep.subr.bf16.mxu0 0
  %476 = vmatpush1.bf16.msra.mxu0 0
  %477 = vmatprep.subr.bf16.mxu0 0
  %478 = vmatpush1.bf16.msra.mxu0 0
  %479 = vmatprep.subr.bf16.mxu0 0
  %480 = vmatpush1.bf16.msra.mxu0 0
  %481 = vmatprep.subr.bf16.mxu0 0
  %482 = vmatpush1.bf16.msra.mxu0 0
  %483 = vmatprep.subr.bf16.mxu0 0
  %484 = vmatpush1.bf16.msra.mxu0 0
  %485 = vmatprep.subr.bf16.mxu0 0
  %486 = vmatpush1.bf16.msra.mxu0 0
  %487 = vmatprep.subr.bf16.mxu0 0
  %488 = vmatpush1.bf16.msra.mxu0 0
  %489 = vmatprep.subr.bf16.mxu0 0
  %490 = vmatpush1.bf16.msra.mxu0 0
  %491 = vmatprep.subr.bf16.mxu0 0
  %492 = vmatpush1.bf16.msra.mxu0 0
  %493 = vmatprep.subr.bf16.mxu0 0
  %494 = vmatpush1.bf16.msra.mxu0 0
  %495 = vmatprep.subr.bf16.mxu0 0
  %496 = vmatpush1.bf16.msra.mxu0 0
  %497 = vmatprep.mubr.bf16.mxu0 0
  %498 = vmatmul.mubr.bf16.gmra.mrb[0].mxu0 %v457
  %v499 = vpop.f32.mrb[0].mxu0
  %v500 = vadd.f32 0.0, %v499
  %v501 = vpop.f32.mrb[0].mxu0
  %v502 = vpop.f32.mrb[0].mxu0
  %v503 = vadd.f32 0.0, %v502
  %v504 = vpop.f32.mrb[0].mxu0
  %505 = vmatprep.mubr.bf16.mxu0 0
  %506 = vmatmul.mubr.bf16.gmra.mrb[0].mxu0 %v460
  %v507 = vpop.f32.mrb[0].mxu0
  %v508 = vadd.f32 0.0, %v507
  %v509 = vpop.f32.mrb[0].mxu0
  %v510 = vpop.f32.mrb[0].mxu0
  %v511 = vadd.f32 0.0, %v510
  %v512 = vpop.f32.mrb[0].mxu0
  %513 = vmatprep.mubr.bf16.mxu0 0
  %514 = vmatmul.mubr.bf16.gmra.mrb[0].mxu0 %v463
  %v515 = vpop.f32.mrb[0].mxu0
  %v516 = vadd.f32 0.0, %v515
  %v517 = vpop.f32.mrb[0].mxu0
  %v518 = vpop.f32.mrb[0].mxu0
  %v519 = vadd.f32 0.0, %v518
  %v520 = vpop.f32.mrb[0].mxu0
  %521 = vdwg.mxu0
  %v522 = vpack.c.bf16 %v503, %v500
  %v523 = vpack.c.bf16 %v511, %v508
  %v524 = vpack.c.bf16 %v519, %v516
  %v528 = vunpack.c.l.b16 %v522
  %v529 = vunpack.c.h.b16 %v522
  %v530 = vunpack.c.l.b16 %v523
  %v531 = vunpack.c.h.b16 %v523
  %v532 = vunpack.c.l.b16 %v524
  %v533 = vunpack.c.h.b16 %v524
  %v534 = vpack.c.b16 %v528, %v528
  %v535 = vpack.c.b16 %v529, %v529
  %v536 = vpack.c.b16 %v530, %v530
  %v537 = vpack.c.b16 %v531, %v531
  %v538 = vpack.c.b16 %v532, %v532
  %v539 = vpack.c.b16 %v533, %v533
  %s546 = scalar_lea.vmem %s3, 48
  %547 = vst [vmem:[%s546] sm:$0xf] %v534
  %548 = vst [vmem:[%s546 + $0x4] sm:$0xf] %v535
  %549 = vst [vmem:[%s546 + $0x8] sm:$0xf] %v536
  %550 = vst [vmem:[%s546 + $0xc] sm:$0xf] %v537
  %551 = vst [vmem:[%s546 + $0x10] sm:$0xf] %v538
  %552 = vst [vmem:[%s546 + $0x14] sm:$0xf] %v539
  // Predicated region
  $region14: #{fn.1} parent=0 // pred_check
    _
  $region15: #{fn.1} parent=0 // pred_check_branch
    %554 = sbr.rel (0) target = $region17
  $region16: #{fn.1} parent=0 // pred_region
    _
  $region17: #{fn.1} parent=0 // pred_fallthru
    _
  // Predicated region
  $region18: #{fn.1} parent=0 // pred_check
    _
  $region19: #{fn.1} parent=0 // pred_check_branch
    %556 = sbr.rel (0) target = $region21
  $region20: #{fn.1} parent=0 // pred_region
    _
  $region21: #{fn.1} parent=0 // pred_fallthru
    _

</llo_original>
